<compile_context>
chip_gen: v7x
topology: tpu7x:2x2x1
jax: 0.10.0
libtpu: 0.0.40
codegen_flags: <defaults>
</compile_context>

<pallas_src>
import jax
import jax.numpy as jnp
from jax.experimental import pallas as pl
from jax.experimental.pallas import tpu as pltpu


def _mimo_embedding_gather_kernel(ids_ref, w_hbm, out_ref, rows_vmem, sem):
    """One grid step gathers one token tile from one embedding table.

    ids_ref  : (num_inputs, N) int32 in SMEM (scalar-prefetched token ids)
    w_hbm    : (num_inputs, V, D) weights, left in HBM (memory_space=pl.ANY)
    out_ref  : (tn, D) f32 output tile, resident across the num_inputs axis
    rows_vmem: (tn, D) VMEM gather buffer
    sem      : scalar DMA semaphore shared by all row copies of this step
    """
    t = pl.program_id(0)          # token-tile index        ("parallel")
    i = pl.program_id(1)          # embedding-table index   ("arbitrary" reduction)
    tn = out_ref.shape[0]
    base = t * tn

    # Issue all tn row DMAs up front so they overlap each other.
    # NOTE: like PyTorch, out-of-range token ids are a caller error (here they
    # would trip the DMA bounds check instead of raising an IndexError).
    @pl.loop(0, tn)
    def _issue(r):
        tok = ids_ref[i, base + r]
        pltpu.make_async_copy(
            w_hbm.at[i, pl.ds(tok, 1), :],        # (1, D) row of table i
            rows_vmem.at[pl.ds(r, 1), :],         # (1, D) destination row
            sem,
        ).start()

    # Zero the resident accumulator while the gather DMAs are in flight.
    @pl.when(i == 0)
    def _():
        out_ref[...] = jnp.zeros_like(out_ref)

    # Drain: every copy has the same size and signals the same semaphore, so
    # tn identical waits account for exactly all tn completions.
    @pl.loop(0, tn)
    def _drain(r):
        pltpu.make_async_copy(
            w_hbm.at[i, pl.ds(0, 1), :],
            rows_vmem.at[pl.ds(0, 1), :],
            sem,
        ).wait()

    # Accumulate this table's contribution into the resident output tile.
    # padding_idx rows are all-zero in the table, so they contribute 0,
    # matching the PyTorch module's initialization semantics.
    out_ref[...] += rows_vmem[...].astype(out_ref.dtype)


def _pick_token_tile(n_tokens, max_tile=256):
    """Largest token tile <= max_tile that evenly divides N (multiple of 8),
    falling back to the full extent (always legal for a BlockSpec)."""
    if n_tokens <= max_tile:
        return n_tokens
    start = max_tile - (max_tile % 8)
    for cand in range(start, 7, -8):
        if n_tokens % cand == 0:
            return cand
    return n_tokens


def mimo_embedding_forward(x, weights):
    """x: (num_inputs * batch, seq_len) integer token ids.
    weights: (num_inputs, V, D) float32 stacked embedding tables.
    Returns (batch, seq_len, D) float32 = sum_i weights[i][x_i]."""
    num_inputs, V, D = weights.shape
    nb, L = x.shape
    assert nb % num_inputs == 0, "leading dim must be num_inputs * batch"
    batch = nb // num_inputs
    N = batch * L

    # mimo_batchify: split leading dim into (num_inputs, batch) and flatten the
    # tokens. ids are int32 and land in SMEM via scalar prefetch (they drive
    # the data-dependent row DMAs, no VMEM/vreg traffic for them).
    ids = x.reshape(num_inputs, N).astype(jnp.int32)

    tn = _pick_token_tile(N)
    grid = (N // tn, num_inputs)

    out = pl.pallas_call(
        _mimo_embedding_gather_kernel,
        out_shape=jax.ShapeDtypeStruct((N, D), jnp.float32),
        grid_spec=pltpu.PrefetchScalarGridSpec(
            num_scalar_prefetch=1,                       # ids -> SMEM
            grid=grid,
            in_specs=[pl.BlockSpec(memory_space=pl.ANY)],  # tables stay in HBM
            out_specs=pl.BlockSpec((tn, D), lambda t, i, ids_ref: (t, 0)),
            scratch_shapes=[
                pltpu.VMEM((tn, D), weights.dtype),      # gather buffer
                pltpu.SemaphoreType.DMA(()),             # shared row-DMA sem
            ],
        ),
        compiler_params=pltpu.CompilerParams(
            # token tiles split across TensorCores (v7x megacore);
            # num_inputs is the serial reduction into the resident output tile.
            dimension_semantics=("parallel", "arbitrary"),
        ),
    )(ids, weights)

    return out.reshape(batch, L, D)


def init_mimo_embedding_weights(key, num_inputs, num_embeddings, embedding_dim,
                                padding_idx=None):
    """Deterministic init matching the PyTorch module:
       N(0, dim^-0.5) per table, padding_idx row zeroed."""
    keys = jax.random.split(key, num_inputs)
    std = embedding_dim ** (-0.5)
    tables = []
    for k in keys:
        w = jax.random.normal(k, (num_embeddings, embedding_dim), jnp.float32) * std
        if padding_idx is not None:
            w = w.at[padding_idx].set(0.0)
        tables.append(w)
    return jnp.stack(tables, axis=0)  # (num_inputs, V, D)


if __name__ == "__main__":
    key = jax.random.PRNGKey(0)

    num_inputs = 2
    num_embeddings = 64
    embedding_dim = 128          # lane-dense output (multiple of 128)
    padding_idx = 1
    batch = 2
    seq_len = 8

    k_w, k_x = jax.random.split(key)
    weights = init_mimo_embedding_weights(
        k_w, num_inputs, num_embeddings, embedding_dim, padding_idx)

    # token ids in [0, V); sprinkle some padding_idx tokens in deterministically
    x = jax.random.randint(k_x, (num_inputs * batch, seq_len), 0, num_embeddings,
                           dtype=jnp.int32)
    x = x.at[0, 0].set(padding_idx).at[2, 3].set(padding_idx)

    out = mimo_embedding_forward(x, weights)
    out = jax.block_until_ready(out)

    # pure-JAX reference check
    ids_ref = x.reshape(num_inputs, batch, seq_len)
    ref = sum(weights[i][ids_ref[i]] for i in range(num_inputs))
    assert out.shape == (batch, seq_len, embedding_dim)
    assert jnp.allclose(out, ref, atol=1e-5, rtol=1e-5)

    print("KERNEL_OK")
</pallas_src>

<mosaic_0001>
module attributes {stable_mosaic.version = 11 : i64} {
  func.func @_mimo_embedding_gather_kernel(%arg0: i32, %arg1: i32, %arg2: memref<2x16xi32, #tpu.memory_space<smem>>, %arg3: memref<2x64x128xf32, #tpu.memory_space<any>>, %arg4: memref<16x128xf32, #tpu.memory_space<vmem>>, %arg5: memref<16x128xf32, #tpu.memory_space<vmem>>, %arg6: memref<!tpu.dma_semaphore, #tpu.memory_space<semaphore_mem>>) attributes {dimension_semantics = [#tpu.dimension_semantics<parallel>, #tpu.dimension_semantics<arbitrary>], iteration_bounds = array<i64: 1, 2>, scalar_prefetch = 1 : i64, scratch_operands = 2 : i64, tpu.core_type = #tpu.core_type<tc>, window_params = [{}, {transform_indices = @transform_1, window_bounds = array<i64: 16, 128>}]} {
    %c16_i32 = arith.constant 16 : i32
    %0 = arith.muli %arg0, %c16_i32 : i32
    %c0_i32 = arith.constant 0 : i32
    %c16_i32_0 = arith.constant 16 : i32
    %1 = arith.addi %c0_i32, %c16_i32_0 : i32
    %c1_i32 = arith.constant 1 : i32
    scf.for %arg7 = %c0_i32 to %1 step %c1_i32  : i32 {
      %c1_i32_12 = arith.constant 1 : i32
      %10 = arith.muli %arg7, %c1_i32_12 : i32
      %c0_i32_13 = arith.constant 0 : i32
      %11 = arith.addi %c0_i32_13, %10 : i32
      %12 = arith.addi %0, %11 : i32
      %13 = arith.index_cast %arg1 : i32 to index
      %14 = arith.index_cast %12 : i32 to index
      %15 = memref.load %arg2[%13, %14] : memref<2x16xi32, #tpu.memory_space<smem>>
      %c0_i32_14 = arith.constant 0 : i32
      %16 = tpu.memref_slice %arg3[%arg1, %15, %c0_i32_14] : memref<2x64x128xf32, #tpu.memory_space<any>> -> memref<1x1x128xf32, #tpu.memory_space<any>>
      %17 = tpu.memref_squeeze %16 : memref<1x1x128xf32, #tpu.memory_space<any>> -> memref<1x128xf32, #tpu.memory_space<any>>
      %c0_i32_15 = arith.constant 0 : i32
      %18 = tpu.memref_slice %arg5[%11, %c0_i32_15] : memref<16x128xf32, #tpu.memory_space<vmem>> -> memref<1x128xf32, #tpu.memory_space<vmem>>
      tpu.enqueue_dma source(%17 : memref<1x128xf32, #tpu.memory_space<any>>) target(%18 : memref<1x128xf32, #tpu.memory_space<vmem>>) target_semaphore(%arg6 : memref<!tpu.dma_semaphore, #tpu.memory_space<semaphore_mem>>)
    }
    %c16_i32_1 = arith.constant 16 : i32
    %c0_i32_2 = arith.constant 0 : i32
    %2 = arith.cmpi eq, %arg1, %c0_i32_2 : i32
    %3 = arith.extui %2 : i1 to i32
    %c0_i32_3 = arith.constant 0 : i32
    %4 = arith.cmpi ne, %3, %c0_i32_3 : i32
    scf.if %4 {
      %cst = arith.constant 0.000000e+00 : f32
      %10 = vector.broadcast %cst : f32 to vector<16x128xf32>
      %c0_12 = arith.constant 0 : index
      %c0_13 = arith.constant 0 : index
      %11 = vector.load %arg4[%c0_12, %c0_13] : memref<16x128xf32, #tpu.memory_space<vmem>>, vector<16x128xf32>
      tpu.vector_store %arg4[%c0_12, %c0_13], %10 {strides = array<i32>} : memref<16x128xf32, #tpu.memory_space<vmem>>, vector<16x128xf32>,
    } else {
    }
    %c0_i32_4 = arith.constant 0 : i32
    %c16_i32_5 = arith.constant 16 : i32
    %5 = arith.addi %c0_i32_4, %c16_i32_5 : i32
    %c1_i32_6 = arith.constant 1 : i32
    scf.for %arg7 = %c0_i32_4 to %5 step %c1_i32_6  : i32 {
      %c0_i32_12 = arith.constant 0 : i32
      %c0_i32_13 = arith.constant 0 : i32
      %10 = tpu.memref_slice %arg3[%arg1, %c0_i32_12, %c0_i32_13] : memref<2x64x128xf32, #tpu.memory_space<any>> -> memref<1x1x128xf32, #tpu.memory_space<any>>
      %11 = tpu.memref_squeeze %10 : memref<1x1x128xf32, #tpu.memory_space<any>> -> memref<1x128xf32, #tpu.memory_space<any>>
      %c0_i32_14 = arith.constant 0 : i32
      %c0_i32_15 = arith.constant 0 : i32
      %12 = tpu.memref_slice %arg5[%c0_i32_14, %c0_i32_15] : memref<16x128xf32, #tpu.memory_space<vmem>> -> memref<1x128xf32, #tpu.memory_space<vmem>>
      tpu.wait_dma2 semaphore(%arg6 : memref<!tpu.dma_semaphore, #tpu.memory_space<semaphore_mem>>) src(%11 : memref<1x128xf32, #tpu.memory_space<any>>) dst(%12 : memref<1x128xf32, #tpu.memory_space<vmem>>)
    }
    %c0 = arith.constant 0 : index
    %c0_7 = arith.constant 0 : index
    %6 = vector.load %arg4[%c0, %c0_7] : memref<16x128xf32, #tpu.memory_space<vmem>>, vector<16x128xf32>
    %c0_8 = arith.constant 0 : index
    %c0_9 = arith.constant 0 : index
    %7 = vector.load %arg5[%c0_8, %c0_9] : memref<16x128xf32, #tpu.memory_space<vmem>>, vector<16x128xf32>
    %8 = arith.addf %6, %7 : vector<16x128xf32>
    %c0_10 = arith.constant 0 : index
    %c0_11 = arith.constant 0 : index
    %9 = vector.load %arg4[%c0_10, %c0_11] : memref<16x128xf32, #tpu.memory_space<vmem>>, vector<16x128xf32>
    tpu.vector_store %arg4[%c0_10, %c0_11], %8 {strides = array<i32>} : memref<16x128xf32, #tpu.memory_space<vmem>>, vector<16x128xf32>,
    return
  }
  func.func @transform_1(%arg0: i32, %arg1: i32, %arg2: memref<2x16xi32, #tpu.memory_space<smem>>) -> (i32, i32) {
    %c0_i32 = arith.constant 0 : i32
    %c0_i32_0 = arith.constant 0 : i32
    return %arg0, %c0_i32 : i32, i32
  }
}

</mosaic_0001>

<llo_original>
// kernel: tpu_custom_call.1
$region0: #{tpu_custom_call.1}
  #allocation0 [shape = 'u32[]', space=smem, size = 0x4, offset = 0x4, fixed_abs, tag = 'smem constant byte address 0x4 - core index']
  #allocation1 [shape = 'u32[144,128]{1,0:T(1,128)}', space=vmem, size = 0x12000, scoped, tag = 'internal scratch']
  #allocation2 [shape = 'f32[16,128]{1,0:T(8,128)}', space=vmem, size = 0x2000, scoped, tag = 'scratch operand']
  #allocation3 [shape = 's32[1]{0}', space=sflag, size = 0x4, scoped, tag = 'scratch operand']
  #allocation4 [shape = 's32[1]{0}', space=sflag, size = 0x4, scoped, tag = 'scoped memory for tpu_custom_call.1']
  #allocation5 [shape = 'u8[1024]{0}', space=smem, size = 0x400, scoped, tag = 'prefetched SMEM operand 0']
  #allocation8 [shape = 's32[]', space=sflag, size = 0x4, offset = 0, fixed_abs, tag = 'sflag constant byte address 0x0 - dummy sync flag']
  #allocation9 [shape = 's32[]', space=sflag, size = 0x4, offset = 0, fixed_abs, tag = 'sflag constant byte address 0x0 - dummy sync flag']
  #allocation10 [shape = 'u32[]', space=smem, size = 0x4, offset = 0x44, fixed_abs, tag = 'smem constant byte address 0x44 - assertion arg 0']
  #allocation11 [shape = 'u32[]', space=smem, size = 0x4, offset = 0x48, fixed_abs, tag = 'smem constant byte address 0x48 - assertion arg 1']
  %s0 = inlined_call_operand.hbm [shape: s32[2,16], index: 0, kind: input, shape index: {}]
  %s1 = inlined_call_operand.hbm [shape: f32[2,64,128], index: 1, kind: input, shape index: {}]
  %s2 = inlined_call_operand.hbm [shape: f32[16,128], index: 2, kind: output, shape index: {}]
  %s3 = sld [smem:[#allocation0]]
  $region47: #{tpu_custom_call.1} parent=0
    _
  %s5 = ssub.s32 1, %s3
  %s6 = scalar_select 0, %s5, %s3
  %8 = dma.hbm_to_smem %s0, 32, [#allocation5], [#allocation4]
  %9 = dma.done [#allocation4], 32
  %10 = sfence
  $region1: #{tpu_custom_call.1} parent=0
    #allocation6 [shape = 'u8[8192]{0}', space=vmem, size = 0x2000, scoped, tag = 'output window, operand 0, single buffered']
    #allocation7 [shape = 's32[2]{0}', space=sflag, size = 0x8, scoped, tag = 'scoped memory for tpu_custom_call.1']
    %11 = vsyncpa [#allocation7], 0
    loop: start=0, step=1, limit=3
    $region2: #{tpu_custom_call.1} parent=1 // loop_pre_header
      _
    $region3: #{tpu_custom_call.1} parent=1 // loop_header
      %s13 = sphi 0, %s17
      %p14 = scmp.ge.s32.totalorder %s13, 3
      %s19 = sphi 0, %s29
      %s20 = sphi 0, %s25
      %s21 = sphi 0, %s19
      %s22 = sphi 0, %s20
      %s32 = sphi 0, %s34
      %s35 = sphi 0, %s32
      %s45 = sphi 0, %s35
    $region4: #{tpu_custom_call.1} parent=1 // loop_header_branch
      %16 = sbr.rel (%p14) target = $region8
    $region5: #{tpu_custom_call.1} parent=1 // loop_body
      %s18 = ssub.s32 %s13, 1
      %s23 = sadd.s32 1, %s20
      %p24 = scmp.ge.s32.totalorder %s23, 2
      %s25 = scalar_select %p24, 0, %s23
      %s26 = sadd.s32 1, %s19
      %s27 = scalar_select %p24, %s26, %s19
      %p28 = scmp.ge.s32.totalorder %s27, 1
      %s29 = scalar_select %p28, 0, %s27
      %s30 = ssub.s32 %s19, %s29
      %p31 = scmp.eq.s32.totalorder %s30, 0
      %s33 = sadd.s32 %s32, 1
      %s34 = scalar_select %p31, %s32, %s33
      %p36 = pneg %p31
      %p37 = scmp.eq.s32.totalorder %s13, 1
      %p38 = por %p36, %p37
      %p39 = scmp.ne.s32.totalorder %s32, %s35
      %p40 = scmp.eq.s32.totalorder %s13, 0
      %p41 = por %p39, %p40
      %p42 = scmp.ne.s32.totalorder %s32, %s35
      %p43 = scmp.eq.s32.totalorder %s18, 1
      %p44 = por %p42, %p43
      %p46 = scmp.ne.s32.totalorder %s35, %s45
      %p47 = scmp.eq.s32.totalorder %s18, 0
      %p48 = por %p46, %p47
      %p49 = scmp.lt.s32.totalorder %s13, 2
      // Predicated region
      $region9: #{tpu_custom_call.1} parent=5 // pred_check
        %p50 = pneg %p49
      $region10: #{tpu_custom_call.1} parent=5 // pred_check_branch
        %52 = sbr.rel (%p50) target = $region12
      $region11: #{tpu_custom_call.1} parent=5 // pred_region
        %p53 = pneg %p41
        %p54 = pneg %p38
        %s55 = smul.u32 2, %s19
        %s56 = smul.u32 %s19, 16
        loop: start=0, step=1, limit=16
        $region13: #{tpu_custom_call.1} parent=11 // loop_pre_header
          _
        $region14: #{tpu_custom_call.1} parent=11 // loop_header
          %s58 = sphi 0, %s62
          %p59 = scmp.ge.s32.totalorder %s58, 16
        $region15: #{tpu_custom_call.1} parent=11 // loop_header_branch
          %61 = sbr.rel (%p59) target = $region19
        $region16: #{tpu_custom_call.1} parent=11 // loop_body
          %s63 = sadd.s32 %s56, %s58
          %s64 = sshra.s32 %s63, 7
          %s65 = sand.u32 %s63, 127
          %s66 = sadd.s32 %s64, %s20
          %s67 = smul.u32 %s66, 128
          %s68 = sshra.s32 %s63, 7
          %s69 = sand.u32 %s63, 127
          %s70 = sadd.s32 %s67, %s69
          %s71 = sld [smem:[#allocation5 + %s70]]
          %s72 = smul.u32 %s20, 64
          %s73 = sadd.s32 %s71, %s72
          %s74 = smul.addr %s73, 16
          %s75 = scalar_lea.hbm %s1, %s74
          %s76 = scalar_lea.vmem [#allocation2], %s58
          // Predicated region
          $region20: #{tpu_custom_call.1} parent=16 // pred_check
            _
          $region21: #{tpu_custom_call.1} parent=16 // pred_check_branch
            %78 = sbr.rel target = $region23
          $region22: #{tpu_custom_call.1} parent=16 // pred_region
            %79 = sst [smem:[#allocation10]] [#allocation9]
            %80 = sst [smem:[#allocation11]] [#allocation8]
          $region23: #{tpu_custom_call.1} parent=16 // pred_fallthru
            _
          %82 = shalt.err (0)
          %s84 = sshll.u32 %s76, 4
          %s85 = int_to_ptr.vmem [resolvable:$true] %s84
          %87 = dma.hbm_to_vmem [thread:$0]  %s75, 16, %s85, [#allocation3]
        $region17: #{tpu_custom_call.1} parent=11 // loop_footer
          %s62 = sadd.s32 1, %s58
        $region18: #{tpu_custom_call.1} parent=11 // loop_footer_branch
          %57 = sbr.rel target = $region14
        $region19: #{tpu_custom_call.1} parent=11 // loop_exit
          _
        %p88 = scmp.eq.s32.totalorder %s20, 0
        // Predicated region
        $region24: #{tpu_custom_call.1} parent=11 // pred_check
          %p89 = pneg %p88
        $region25: #{tpu_custom_call.1} parent=11 // pred_check_branch
          %91 = sbr.rel (%p89) target = $region27
        $region26: #{tpu_custom_call.1} parent=11 // pred_region
          %92 = vst [vmem:[#allocation6] sm:$0xff] 0.0
          %93 = vst [vmem:[#allocation6 + $0x8] sm:$0xff] 0.0
        $region27: #{tpu_custom_call.1} parent=11 // pred_fallthru
          _
        loop: start=0, step=1, limit=16
        $region28: #{tpu_custom_call.1} parent=11 // loop_pre_header
          _
        $region29: #{tpu_custom_call.1} parent=11 // loop_header
          %s95 = sphi 0, %s99
          %p96 = scmp.ge.s32.totalorder %s95, 16
        $region30: #{tpu_custom_call.1} parent=11 // loop_header_branch
          %98 = sbr.rel (%p96) target = $region34
        $region31: #{tpu_custom_call.1} parent=11 // loop_body
          %s100 = smul.u32 1, 1
          %s101 = sshll.u32 %s100, 4
          %102 = dma.done [#allocation3], %s101
        $region32: #{tpu_custom_call.1} parent=11 // loop_footer
          %s99 = sadd.s32 1, %s95
        $region33: #{tpu_custom_call.1} parent=11 // loop_footer_branch
          %94 = sbr.rel target = $region29
        $region34: #{tpu_custom_call.1} parent=11 // loop_exit
          _
        %v103 = vld [vmem:[#allocation6] sm:$0xff]
        %v104 = vld [vmem:[#allocation6 + $0x8] sm:$0xff]
        %v105 = vld [vmem:[#allocation2] sm:$0xff]
        %v106 = vld [vmem:[#allocation2 + $0x8] sm:$0xff]
        %v107 = vadd.f32 %v103, %v105
        %v108 = vadd.f32 %v104, %v106
        %109 = vst [vmem:[#allocation6] sm:$0xff] %v107
        %110 = vst [vmem:[#allocation6 + $0x8] sm:$0xff] %v108
        // Predicated region
        $region35: #{tpu_custom_call.1} parent=11 // pred_check
          %p111 = pneg %p38
        $region36: #{tpu_custom_call.1} parent=11 // pred_check_branch
          %113 = sbr.rel (%p111) target = $region38
        $region37: #{tpu_custom_call.1} parent=11 // pred_region
          %s114 = smul.u32 2, %s19
          %s116 = ssub.s32 256, 256
          %117 = vsyncadd [#allocation7], %s116
          %s118 = smul.addr %s114, 128
          %s119 = scalar_lea.hbm %s2, %s118
          %s120 = sshll.u32 [#allocation6], 4
          %s121 = int_to_ptr.vmem [resolvable:$true] %s120
          %126 = dma.vmem_to_hbm [thread:$0]  %s121, 256, %s119, [#allocation7], 128, 128, 8
        $region38: #{tpu_custom_call.1} parent=11 // pred_fallthru
          _
        // Predicated region
        $region39: #{tpu_custom_call.1} parent=11 // pred_check
          %p127 = pneg %p38
        $region40: #{tpu_custom_call.1} parent=11 // pred_check_branch
          %129 = sbr.rel (%p127) target = $region42
        $region41: #{tpu_custom_call.1} parent=11 // pred_region
          %130 = dma.done [#allocation7], 256
        $region42: #{tpu_custom_call.1} parent=11 // pred_fallthru
          _
      $region12: #{tpu_custom_call.1} parent=5 // pred_fallthru
        _
      %p131 = scmp.le.s32.totalorder 1, %s13
      // Predicated region
      $region43: #{tpu_custom_call.1} parent=5 // pred_check
        %p132 = pneg %p131
      $region44: #{tpu_custom_call.1} parent=5 // pred_check_branch
        %134 = sbr.rel (%p132) target = $region46
      $region45: #{tpu_custom_call.1} parent=5 // pred_region
        %s135 = ssub.s32 %s13, 1
      $region46: #{tpu_custom_call.1} parent=5 // pred_fallthru
        _
    $region6: #{tpu_custom_call.1} parent=1 // loop_footer
      %s17 = sadd.s32 1, %s13
    $region7: #{tpu_custom_call.1} parent=1 // loop_footer_branch
      %12 = sbr.rel target = $region3
    $region8: #{tpu_custom_call.1} parent=1 // loop_exit
      _
    %136 = vsyncpa [#allocation7], 1
    %s137 = scalar_lea.sflag [#allocation7], 1
    %138 = vsyncpa %s137, 1
  %139 = vsyncmov [#allocation3]
  %s140 = vpop.sfrf %139
  %p141 = scmp.eq.s32.totalorder %s140, 0
  %p142 = pneg %p141
  %144 = shalt.err (%p142)

</llo_original>
